<compile_context>
chip_gen: v5e
topology: v5e:2x2
jax: 0.10.0
libtpu: 0.0.40
codegen_flags: <defaults>
</compile_context>

<pallas_src>
import jax
import jax.numpy as jnp
from jax.experimental import pallas as pl
from jax.experimental.pallas import tpu as pltpu


# Tile caps (bf16): 2 * (TK*TM + TM*128 + 8*TK) * 2B  <<  32 MiB on all of v5e/v6e/v7x.
_TK_MAX = 1024
_TM_MAX = 1024


def _round_up(x, m):
    return ((x + m - 1) // m) * m


# ----------------------------------------------------------------------------
# Pallas kernel:  grid = (num_m_tiles, num_k_tiles)
#   h_acc (B, tm) f32 : accumulates xw @ G over K tiles (reset at k == 0)
#   z_acc (B, L)  f32 : accumulates tanh(h + b1) @ W_lin over M tiles
# ----------------------------------------------------------------------------
def _quadconv_encoder_kernel(xw_ref, g_ref, b1_ref, wlin_ref, blin_ref,
                             out_ref, h_acc, z_acc):
    m = pl.program_id(0)
    k = pl.program_id(1)
    nm = pl.num_programs(0)
    nk = pl.num_programs(1)

    @pl.when(jnp.logical_and(m == 0, k == 0))
    def _():
        z_acc[...] = jnp.zeros_like(z_acc)

    @pl.when(k == 0)
    def _():
        h_acc[...] = jnp.zeros_like(h_acc)

    # quadrature-convolution contraction tile: (B, tk) @ (tk, tm) -> f32 accumulate
    h_acc[...] += jnp.dot(xw_ref[...], g_ref[...],
                          preferred_element_type=jnp.float32)

    @pl.when(k == nk - 1)
    def _():
        # finish this M-tile of h: per-output-channel bias + tanh (kept in f32),
        # then immediately fold it into the latent projection (reduction over M).
        h = jnp.tanh(h_acc[...] + b1_ref[...])
        z_acc[...] += jnp.dot(h.astype(wlin_ref.dtype), wlin_ref[...],
                              preferred_element_type=jnp.float32)

    @pl.when(jnp.logical_and(m == nm - 1, k == nk - 1))
    def _():
        out_ref[...] = jnp.tanh(z_acc[...] + blin_ref[...]).astype(out_ref.dtype)


# ----------------------------------------------------------------------------
# One-time setup: build the quadrature-weighted filter matrix and padded/bf16
# operands.  Mesh + encoder params are static between forward calls
# (`mesh.reset()` restores the deterministic initial mesh -> no-op here).
# ----------------------------------------------------------------------------
def build_encoder_operands(params, mesh):
    x_in, x_out, w_quad = mesh                     # (Nin, dim), (Nout, dim), (Nin,)
    N_in = x_in.shape[0]
    N_out = x_out.shape[0]
    C_out = params["bias"].shape[0]
    C_in = params["mlp_w2"].shape[1] // C_out
    latent = params["lin_w"].shape[1]

    # filter MLP G_theta(y_i - x_j)  (data independent)
    d = x_out[:, None, :] - x_in[None, :, :]                          # (Nout, Nin, dim)
    hm = jnp.tanh(d @ params["mlp_w1"] + params["mlp_b1"])            # (Nout, Nin, H)
    g = hm @ params["mlp_w2"] + params["mlp_b2"]                      # (Nout, Nin, Cout*Cin)
    g = g.reshape(N_out, N_in, C_out, C_in)

    # fold quadrature weights into the filter:  (X*w) @ G == X @ (diag(w) G)
    g = g * w_quad[None, :, None, None]

    # G_mat[ci*Nin + j, co*Nout + i] = w_j * g[i, j, co, ci]
    # Column (and bias / lin_w row) ordering matches a (B, Cout, Nout) flatten.
    g_mat = jnp.transpose(g, (3, 1, 2, 0)).reshape(C_in * N_in, C_out * N_out)

    b1 = jnp.repeat(params["bias"], N_out)[None, :]                   # (1, M) f32
    wlin = params["lin_w"]                                            # (M, L)
    blin = params["lin_b"][None, :]                                   # (1, L) f32

    K = C_in * N_in
    M = C_out * N_out

    # tile / pad sizes (lane-dense last dims, sublane-aligned reductions)
    tk = min(_round_up(K, 128), _TK_MAX)
    tm = min(_round_up(M, 128), _TM_MAX)
    K_pad = _round_up(K, tk)
    M_pad = _round_up(M, tm)
    L_pad = _round_up(latent, 128)

    g_mat = jnp.pad(g_mat, ((0, K_pad - K), (0, M_pad - M))).astype(jnp.bfloat16)
    b1 = jnp.pad(b1, ((0, 0), (0, M_pad - M)))
    wlin = jnp.pad(wlin, ((0, M_pad - M), (0, L_pad - latent))).astype(jnp.bfloat16)
    blin = jnp.pad(blin, ((0, 0), (0, L_pad - latent)))

    meta = dict(C_in=C_in, N_in=N_in, K=K, K_pad=K_pad, M_pad=M_pad,
                latent=latent, L_pad=L_pad, tk=tk, tm=tm)
    return dict(g_mat=g_mat, b1=b1, wlin=wlin, blin=blin, meta=meta)


# ----------------------------------------------------------------------------
# Per-call forward: only reshape/pad X and run the fused Pallas kernel.
# ----------------------------------------------------------------------------
def quadconv_encoder_forward(X, operands):
    meta = operands["meta"]
    B, C_in, N_in = X.shape
    assert C_in == meta["C_in"] and N_in == meta["N_in"]
    K, K_pad = meta["K"], meta["K_pad"]
    M_pad, latent, L_pad = meta["M_pad"], meta["latent"], meta["L_pad"]
    tk, tm = meta["tk"], meta["tm"]

    B_pad = max(_round_up(B, 8), 8)                 # sublane-aligned batch rows
    xw = X.reshape(B, K)                            # quadrature weights already in G
    xw = jnp.pad(xw, ((0, B_pad - B), (0, K_pad - K))).astype(jnp.bfloat16)

    num_m = M_pad // tm
    num_k = K_pad // tk

    cost = pl.CostEstimate(
        flops=2 * B_pad * K_pad * M_pad + 2 * B_pad * M_pad * L_pad,
        transcendentals=B_pad * (M_pad + L_pad),
        bytes_accessed=2 * (B_pad * K_pad + K_pad * M_pad + M_pad * L_pad)
                       + 4 * (M_pad + L_pad + B_pad * L_pad),
    )

    out = pl.pallas_call(
        _quadconv_encoder_kernel,
        out_shape=jax.ShapeDtypeStruct((B_pad, L_pad), jnp.float32),
        grid_spec=pltpu.PrefetchScalarGridSpec(
            num_scalar_prefetch=0,
            grid=(num_m, num_k),
            in_specs=[
                pl.BlockSpec((B_pad, tk), lambda m, k: (0, k)),     # xw
                pl.BlockSpec((tk, tm), lambda m, k: (k, m)),        # G_mat tile
                pl.BlockSpec((1, tm), lambda m, k: (0, m)),         # conv bias
                pl.BlockSpec((tm, L_pad), lambda m, k: (m, 0)),     # W_lin tile
                pl.BlockSpec((1, L_pad), lambda m, k: (0, 0)),      # lin bias
            ],
            out_specs=pl.BlockSpec((B_pad, L_pad), lambda m, k: (0, 0)),
            scratch_shapes=[
                pltpu.VMEM((B_pad, tm), jnp.float32),    # h accumulator (over K)
                pltpu.VMEM((B_pad, L_pad), jnp.float32), # z accumulator (over M)
            ],
        ),
        compiler_params=pltpu.CompilerParams(
            # Both grid axes carry VMEM accumulators (h over K, z over M) so both
            # must be "arbitrary".
            # TODO(synk): expose a "parallel" batch-tile axis for v7x's 2 TCs once
            # the batch is large enough to tile (B >= 16).
            dimension_semantics=("arbitrary", "arbitrary"),
            vmem_limit_bytes=32 * 1024 * 1024,
        ),
        cost_estimate=cost,
    )(xw, operands["g_mat"], operands["b1"], operands["wlin"], operands["blin"])

    return out[:B, :latent]


# ----------------------------------------------------------------------------
# Pure-JAX reference (f32 throughout) for correctness checking
# ----------------------------------------------------------------------------
def quadconv_encoder_reference(X, params, mesh):
    x_in, x_out, w_quad = mesh
    B, C_in, N_in = X.shape
    N_out = x_out.shape[0]
    C_out = params["bias"].shape[0]
    d = x_out[:, None, :] - x_in[None, :, :]
    hm = jnp.tanh(d @ params["mlp_w1"] + params["mlp_b1"])
    g = (hm @ params["mlp_w2"] + params["mlp_b2"]).reshape(N_out, N_in, C_out, C_in)
    h = jnp.einsum("ijoc,j,bcj->boi", g, w_quad, X)
    h = jnp.tanh(h + params["bias"][None, :, None])
    z = h.reshape(B, C_out * N_out) @ params["lin_w"] + params["lin_b"]
    return jnp.tanh(z)


# ----------------------------------------------------------------------------
# Deterministic parameter / mesh construction
# ----------------------------------------------------------------------------
def make_params(key, *, dim=2, mlp_hidden=16, c_in=4, c_out=8, n_out=16, latent=32):
    ks = jax.random.split(key, 6)
    scale = 0.1
    return {
        "mlp_w1": scale * jax.random.normal(ks[0], (dim, mlp_hidden), jnp.float32),
        "mlp_b1": jnp.zeros((mlp_hidden,), jnp.float32),
        "mlp_w2": scale * jax.random.normal(ks[1], (mlp_hidden, c_out * c_in), jnp.float32),
        "mlp_b2": jnp.zeros((c_out * c_in,), jnp.float32),
        "bias": scale * jax.random.normal(ks[2], (c_out,), jnp.float32),
        "lin_w": scale * jax.random.normal(ks[3], (c_out * n_out, latent), jnp.float32),
        "lin_b": jnp.zeros((latent,), jnp.float32),
    }


def make_mesh(*, n_in=16, n_out=16, dim=2):
    t_in = jnp.linspace(0.0, 1.0, n_in)
    t_out = jnp.linspace(0.0, 1.0, n_out)
    x_in = jnp.stack([t_in, jnp.sin(2.0 * jnp.pi * t_in)], axis=-1).astype(jnp.float32)
    x_out = jnp.stack([t_out, jnp.sin(2.0 * jnp.pi * t_out)], axis=-1).astype(jnp.float32)
    w_quad = jnp.full((n_in,), 1.0 / n_in, jnp.float32)   # uniform quadrature weights
    return (x_in, x_out, w_quad)


if __name__ == "__main__":
    B, C_IN, N_IN = 2, 4, 16
    C_OUT, N_OUT, LATENT = 8, 16, 32

    key = jax.random.PRNGKey(0)
    k_x, k_p = jax.random.split(key)
    X = jax.random.normal(k_x, (B, C_IN, N_IN), jnp.float32)     # (batch, channels, points)
    params = make_params(k_p, c_in=C_IN, c_out=C_OUT, n_out=N_OUT, latent=LATENT)
    mesh = make_mesh(n_in=N_IN, n_out=N_OUT)

    # One-time setup (mesh + encoder params are static across forward calls).
    operands = build_encoder_operands(params, mesh)

    out = quadconv_encoder_forward(X, operands)
    jax.block_until_ready(out)

    assert out.shape == (B, LATENT) and out.dtype == jnp.float32
    ref = quadconv_encoder_reference(X, params, mesh)
    err = float(jnp.max(jnp.abs(out - ref)))
    assert err < 2e-2, f"max abs err {err}"
    print("KERNEL_OK")
</pallas_src>

<mosaic_0001>
module attributes {stable_mosaic.version = 11 : i64} {
  func.func @_quadconv_encoder_kernel(%arg0: i32, %arg1: i32, %arg2: memref<8x128xbf16, #tpu.memory_space<vmem>>, %arg3: memref<128x128xbf16, #tpu.memory_space<vmem>>, %arg4: memref<1x128xf32, #tpu.memory_space<vmem>>, %arg5: memref<128x128xbf16, #tpu.memory_space<vmem>>, %arg6: memref<1x128xf32, #tpu.memory_space<vmem>>, %arg7: memref<8x128xf32, #tpu.memory_space<vmem>>, %arg8: memref<8x128xf32, #tpu.memory_space<vmem>>, %arg9: memref<8x128xf32, #tpu.memory_space<vmem>>) attributes {dimension_semantics = [#tpu.dimension_semantics<arbitrary>, #tpu.dimension_semantics<arbitrary>], iteration_bounds = array<i64: 1, 1>, scalar_prefetch = 0 : i64, scratch_operands = 2 : i64, tpu.core_type = #tpu.core_type<tc>, window_params = [{transform_indices = @transform_0, window_bounds = array<i64: 8, 128>}, {transform_indices = @transform_1, window_bounds = array<i64: 128, 128>}, {transform_indices = @transform_2, window_bounds = array<i64: 1, 128>}, {transform_indices = @transform_3, window_bounds = array<i64: 128, 128>}, {pipeline_mode = #tpu.pipeline_mode<synchronous>, transform_indices = @transform_4, window_bounds = array<i64: 1, 128>}, {pipeline_mode = #tpu.pipeline_mode<synchronous>, transform_indices = @transform_5, window_bounds = array<i64: 8, 128>}]} {
    %c0_i32 = arith.constant 0 : i32
    %0 = arith.cmpi eq, %arg0, %c0_i32 : i32
    %c0_i32_0 = arith.constant 0 : i32
    %1 = arith.cmpi eq, %arg1, %c0_i32_0 : i32
    %2 = arith.andi %0, %1 : i1
    %3 = arith.extui %2 : i1 to i32
    %c0_i32_1 = arith.constant 0 : i32
    %4 = arith.cmpi ne, %3, %c0_i32_1 : i32
    scf.if %4 {
      %cst_16 = arith.constant 0.000000e+00 : f32
      %22 = vector.broadcast %cst_16 : f32 to vector<8x128xf32>
      %c0_17 = arith.constant 0 : index
      %c0_18 = arith.constant 0 : index
      %23 = vector.load %arg9[%c0_17, %c0_18] : memref<8x128xf32, #tpu.memory_space<vmem>>, vector<8x128xf32>
      tpu.vector_store %arg9[%c0_17, %c0_18], %22 {strides = array<i32>} : memref<8x128xf32, #tpu.memory_space<vmem>>, vector<8x128xf32>,
    } else {
    }
    %c0_i32_2 = arith.constant 0 : i32
    %5 = arith.cmpi eq, %arg1, %c0_i32_2 : i32
    %6 = arith.extui %5 : i1 to i32
    %c0_i32_3 = arith.constant 0 : i32
    %7 = arith.cmpi ne, %6, %c0_i32_3 : i32
    scf.if %7 {
      %cst_16 = arith.constant 0.000000e+00 : f32
      %22 = vector.broadcast %cst_16 : f32 to vector<8x128xf32>
      %c0_17 = arith.constant 0 : index
      %c0_18 = arith.constant 0 : index
      %23 = vector.load %arg8[%c0_17, %c0_18] : memref<8x128xf32, #tpu.memory_space<vmem>>, vector<8x128xf32>
      tpu.vector_store %arg8[%c0_17, %c0_18], %22 {strides = array<i32>} : memref<8x128xf32, #tpu.memory_space<vmem>>, vector<8x128xf32>,
    } else {
    }
    %c0 = arith.constant 0 : index
    %c0_4 = arith.constant 0 : index
    %8 = vector.load %arg8[%c0, %c0_4] : memref<8x128xf32, #tpu.memory_space<vmem>>, vector<8x128xf32>
    %c0_5 = arith.constant 0 : index
    %c0_6 = arith.constant 0 : index
    %9 = vector.load %arg2[%c0_5, %c0_6] : memref<8x128xbf16, #tpu.memory_space<vmem>>, vector<8x128xbf16>
    %c0_7 = arith.constant 0 : index
    %c0_8 = arith.constant 0 : index
    %10 = vector.load %arg3[%c0_7, %c0_8] : memref<128x128xbf16, #tpu.memory_space<vmem>>, vector<128x128xbf16>
    %cst = arith.constant dense<0.000000e+00> : vector<8x128xf32>
    %11 = tpu.matmul %9, %10, %cst {dimension_numbers = #tpu.dot_dimension_numbers<[1], [0], [0], [1], [0, 0, 1, 1], [], []>} : vector<8x128xbf16>, vector<128x128xbf16>, vector<8x128xf32> -> vector<8x128xf32>
    %12 = arith.addf %8, %11 : vector<8x128xf32>
    %c0_9 = arith.constant 0 : index
    %c0_10 = arith.constant 0 : index
    %13 = vector.load %arg8[%c0_9, %c0_10] : memref<8x128xf32, #tpu.memory_space<vmem>>, vector<8x128xf32>
    tpu.vector_store %arg8[%c0_9, %c0_10], %12 {strides = array<i32>} : memref<8x128xf32, #tpu.memory_space<vmem>>, vector<8x128xf32>,
    %c0_i32_11 = arith.constant 0 : i32
    %14 = arith.cmpi eq, %arg1, %c0_i32_11 : i32
    %15 = arith.extui %14 : i1 to i32
    %c0_i32_12 = arith.constant 0 : i32
    %16 = arith.cmpi ne, %15, %c0_i32_12 : i32
    scf.if %16 {
      %c0_16 = arith.constant 0 : index
      %c0_17 = arith.constant 0 : index
      %22 = vector.load %arg8[%c0_16, %c0_17] : memref<8x128xf32, #tpu.memory_space<vmem>>, vector<8x128xf32>
      %c0_18 = arith.constant 0 : index
      %c0_19 = arith.constant 0 : index
      %23 = vector.load %arg4[%c0_18, %c0_19] : memref<1x128xf32, #tpu.memory_space<vmem>>, vector<1x128xf32>
      %24 = vector.broadcast %23 : vector<1x128xf32> to vector<8x128xf32>
      %25 = arith.addf %22, %24 : vector<8x128xf32>
      %26 = math.tanh %25 : vector<8x128xf32>
      %c0_20 = arith.constant 0 : index
      %c0_21 = arith.constant 0 : index
      %27 = vector.load %arg9[%c0_20, %c0_21] : memref<8x128xf32, #tpu.memory_space<vmem>>, vector<8x128xf32>
      %28 = arith.truncf %26 : vector<8x128xf32> to vector<8x128xbf16>
      %c0_22 = arith.constant 0 : index
      %c0_23 = arith.constant 0 : index
      %29 = vector.load %arg5[%c0_22, %c0_23] : memref<128x128xbf16, #tpu.memory_space<vmem>>, vector<128x128xbf16>
      %cst_24 = arith.constant dense<0.000000e+00> : vector<8x128xf32>
      %30 = tpu.matmul %28, %29, %cst_24 {dimension_numbers = #tpu.dot_dimension_numbers<[1], [0], [0], [1], [0, 0, 1, 1], [], []>} : vector<8x128xbf16>, vector<128x128xbf16>, vector<8x128xf32> -> vector<8x128xf32>
      %31 = arith.addf %27, %30 : vector<8x128xf32>
      %c0_25 = arith.constant 0 : index
      %c0_26 = arith.constant 0 : index
      %32 = vector.load %arg9[%c0_25, %c0_26] : memref<8x128xf32, #tpu.memory_space<vmem>>, vector<8x128xf32>
      tpu.vector_store %arg9[%c0_25, %c0_26], %31 {strides = array<i32>} : memref<8x128xf32, #tpu.memory_space<vmem>>, vector<8x128xf32>,
    } else {
    }
    %c0_i32_13 = arith.constant 0 : i32
    %17 = arith.cmpi eq, %arg0, %c0_i32_13 : i32
    %c0_i32_14 = arith.constant 0 : i32
    %18 = arith.cmpi eq, %arg1, %c0_i32_14 : i32
    %19 = arith.andi %17, %18 : i1
    %20 = arith.extui %19 : i1 to i32
    %c0_i32_15 = arith.constant 0 : i32
    %21 = arith.cmpi ne, %20, %c0_i32_15 : i32
    scf.if %21 {
      %c0_16 = arith.constant 0 : index
      %c0_17 = arith.constant 0 : index
      %22 = vector.load %arg9[%c0_16, %c0_17] : memref<8x128xf32, #tpu.memory_space<vmem>>, vector<8x128xf32>
      %c0_18 = arith.constant 0 : index
      %c0_19 = arith.constant 0 : index
      %23 = vector.load %arg6[%c0_18, %c0_19] : memref<1x128xf32, #tpu.memory_space<vmem>>, vector<1x128xf32>
      %24 = vector.broadcast %23 : vector<1x128xf32> to vector<8x128xf32>
      %25 = arith.addf %22, %24 : vector<8x128xf32>
      %26 = math.tanh %25 : vector<8x128xf32>
      %c0_20 = arith.constant 0 : index
      %c0_21 = arith.constant 0 : index
      %27 = vector.load %arg7[%c0_20, %c0_21] : memref<8x128xf32, #tpu.memory_space<vmem>>, vector<8x128xf32>
      tpu.vector_store %arg7[%c0_20, %c0_21], %26 {strides = array<i32>} : memref<8x128xf32, #tpu.memory_space<vmem>>, vector<8x128xf32>,
    } else {
    }
    return
  }
  func.func @transform_0(%arg0: i32, %arg1: i32) -> (i32, i32) {
    %c0_i32 = arith.constant 0 : i32
    %c0_i32_0 = arith.constant 0 : i32
    return %c0_i32, %arg1 : i32, i32
  }
  func.func @transform_1(%arg0: i32, %arg1: i32) -> (i32, i32) {
    %c0_i32 = arith.constant 0 : i32
    return %arg1, %arg0 : i32, i32
  }
  func.func @transform_2(%arg0: i32, %arg1: i32) -> (i32, i32) {
    %c0_i32 = arith.constant 0 : i32
    %c0_i32_0 = arith.constant 0 : i32
    return %c0_i32, %arg0 : i32, i32
  }
  func.func @transform_3(%arg0: i32, %arg1: i32) -> (i32, i32) {
    %c0_i32 = arith.constant 0 : i32
    %c0_i32_0 = arith.constant 0 : i32
    return %arg0, %c0_i32 : i32, i32
  }
  func.func @transform_4(%arg0: i32, %arg1: i32) -> (i32, i32) {
    %c0_i32 = arith.constant 0 : i32
    %c0_i32_0 = arith.constant 0 : i32
    %c0_i32_1 = arith.constant 0 : i32
    return %c0_i32, %c0_i32_0 : i32, i32
  }
  func.func @transform_5(%arg0: i32, %arg1: i32) -> (i32, i32) {
    %c0_i32 = arith.constant 0 : i32
    %c0_i32_0 = arith.constant 0 : i32
    %c0_i32_1 = arith.constant 0 : i32
    return %c0_i32, %c0_i32_0 : i32, i32
  }
}

</mosaic_0001>

<llo_original>
// kernel: tpu_custom_call.1
$region0: #{tpu_custom_call.1}
  #allocation0 [shape = 'u32[]', space=smem, size = 0x4, offset = 0x4, fixed_abs, tag = 'smem constant byte address 0x4 - core index']
  #allocation1 [shape = 'u32[72,128]{1,0:T(1,128)}', space=vmem, size = 0x9000, scoped, tag = 'internal scratch']
  #allocation2 [shape = 'f32[8,128]{1,0:T(8,128)}', space=vmem, size = 0x1000, scoped, tag = 'scratch operand']
  #allocation3 [shape = 'f32[8,128]{1,0:T(8,128)}', space=vmem, size = 0x1000, scoped, tag = 'scratch operand']
  %s0 = inlined_call_operand.hbm [shape: bf16[8,128], index: 0, kind: input, shape index: {}]
  %s1 = inlined_call_operand.hbm [shape: bf16[128,128], index: 1, kind: input, shape index: {}]
  %s2 = inlined_call_operand.vmem [shape: f32[1,128], index: 2, kind: input, shape index: {}]
  %s3 = inlined_call_operand.hbm [shape: bf16[128,128], index: 3, kind: input, shape index: {}]
  %s4 = inlined_call_operand.vmem [shape: f32[1,128], index: 4, kind: input, shape index: {}]
  %s5 = inlined_call_operand.hbm [shape: f32[8,128], index: 5, kind: output, shape index: {}]
  %s6 = sld [smem:[#allocation0]]
  $region58: #{tpu_custom_call.1} parent=0
    _
  %s8 = ssub.s32 1, %s6
  %s9 = scalar_select 0, %s8, %s6
  $region1: #{tpu_custom_call.1} parent=0
    #allocation4 [shape = 'u8[2048]{0}', space=vmem, size = 0x800, scoped, tag = 'input window, operand 0, single buffered']
    #allocation5 [shape = 's32[1]{0}', space=sflag, size = 0x4, scoped, tag = 'scoped memory for tpu_custom_call.1']
    #allocation6 [shape = 's32[1]{0}', space=sflag, size = 0x4, scoped, tag = 'scoped memory for tpu_custom_call.1']
    #allocation7 [shape = 'u8[32768]{0}', space=vmem, size = 0x8000, scoped, tag = 'input window, operand 1, single buffered']
    #allocation8 [shape = 's32[1]{0}', space=sflag, size = 0x4, scoped, tag = 'scoped memory for tpu_custom_call.1']
    #allocation9 [shape = 'u8[32768]{0}', space=vmem, size = 0x8000, scoped, tag = 'input window, operand 3, single buffered']
    #allocation10 [shape = 'u8[4096]{0}', space=vmem, size = 0x1000, scoped, tag = 'output window, operand 0, single buffered']
    %10 = vsyncpa [#allocation5], 0
    %11 = vsyncpa [#allocation8], 0
    %12 = vsyncpa [#allocation6], 0
    // Predicated region
    $region2: #{tpu_custom_call.1} parent=1 // pred_check
      _
    $region3: #{tpu_custom_call.1} parent=1 // pred_check_branch
      %14 = sbr.rel (0) target = $region5
    $region4: #{tpu_custom_call.1} parent=1 // pred_region
      %16 = vsyncadd [#allocation5], 0
      %s18 = sshll.u32 %s0, 4
      %s19 = int_to_ptr.hbm [resolvable:$true] %s18
      %s20 = sshll.u32 [#allocation4], 4
      %s21 = int_to_ptr.vmem [resolvable:$true] %s20
      %23 = dma.hbm_to_vmem [thread:$0]  %s19, 64, %s21, [#allocation5]
    $region5: #{tpu_custom_call.1} parent=1 // pred_fallthru
      _
    // Predicated region
    $region6: #{tpu_custom_call.1} parent=1 // pred_check
      _
    $region7: #{tpu_custom_call.1} parent=1 // pred_check_branch
      %25 = sbr.rel (0) target = $region9
    $region8: #{tpu_custom_call.1} parent=1 // pred_region
      %27 = vsyncadd [#allocation8], 0
      %s28 = sshll.u32 %s1, 4
      %s29 = int_to_ptr.hbm [resolvable:$true] %s28
      %s30 = sshll.u32 [#allocation7], 4
      %s31 = int_to_ptr.vmem [resolvable:$true] %s30
      %36 = dma.hbm_to_vmem [thread:$0]  %s29, 1024, %s31, [#allocation8], 64, 64, 4
    $region9: #{tpu_custom_call.1} parent=1 // pred_fallthru
      _
    // Predicated region
    $region10: #{tpu_custom_call.1} parent=1 // pred_check
      _
    $region11: #{tpu_custom_call.1} parent=1 // pred_check_branch
      %38 = sbr.rel (0) target = $region13
    $region12: #{tpu_custom_call.1} parent=1 // pred_region
      _
    $region13: #{tpu_custom_call.1} parent=1 // pred_fallthru
      _
    // Predicated region
    $region14: #{tpu_custom_call.1} parent=1 // pred_check
      _
    $region15: #{tpu_custom_call.1} parent=1 // pred_check_branch
      %40 = sbr.rel (0) target = $region17
    $region16: #{tpu_custom_call.1} parent=1 // pred_region
      %42 = vsyncadd [#allocation8], 0
      %s43 = sshll.u32 %s3, 4
      %s44 = int_to_ptr.hbm [resolvable:$true] %s43
      %s45 = sshll.u32 [#allocation9], 4
      %s46 = int_to_ptr.vmem [resolvable:$true] %s45
      %51 = dma.hbm_to_vmem [thread:$0]  %s44, 1024, %s46, [#allocation8], 64, 64, 4
    $region17: #{tpu_custom_call.1} parent=1 // pred_fallthru
      _
    // Predicated region
    $region18: #{tpu_custom_call.1} parent=1 // pred_check
      _
    $region19: #{tpu_custom_call.1} parent=1 // pred_check_branch
      %53 = sbr.rel (0) target = $region21
    $region20: #{tpu_custom_call.1} parent=1 // pred_region
      _
    $region21: #{tpu_custom_call.1} parent=1 // pred_fallthru
      _
    // Predicated region
    $region22: #{tpu_custom_call.1} parent=1 // pred_check
      _
    $region23: #{tpu_custom_call.1} parent=1 // pred_check_branch
      %55 = sbr.rel (0) target = $region25
    $region24: #{tpu_custom_call.1} parent=1 // pred_region
      %57 = dma.done [#allocation5], 64
    $region25: #{tpu_custom_call.1} parent=1 // pred_fallthru
      _
    // Predicated region
    $region26: #{tpu_custom_call.1} parent=1 // pred_check
      _
    $region27: #{tpu_custom_call.1} parent=1 // pred_check_branch
      %59 = sbr.rel (0) target = $region29
    $region28: #{tpu_custom_call.1} parent=1 // pred_region
      %61 = dma.done [#allocation8], 1024
    $region29: #{tpu_custom_call.1} parent=1 // pred_fallthru
      _
    // Predicated region
    $region30: #{tpu_custom_call.1} parent=1 // pred_check
      _
    $region31: #{tpu_custom_call.1} parent=1 // pred_check_branch
      %63 = sbr.rel (0) target = $region33
    $region32: #{tpu_custom_call.1} parent=1 // pred_region
      %65 = dma.done [#allocation8], 1024
    $region33: #{tpu_custom_call.1} parent=1 // pred_fallthru
      _
    %p66 = scmp.eq.s32.totalorder 0, 0
    %p67 = scmp.eq.s32.totalorder 0, 0
    %p68 = pnand %p66, %p67
    %p69 = pneg %p68
    // Predicated region
    $region34: #{tpu_custom_call.1} parent=1 // pred_check
      _
    $region35: #{tpu_custom_call.1} parent=1 // pred_check_branch
      %71 = sbr.rel (%p68) target = $region37
    $region36: #{tpu_custom_call.1} parent=1 // pred_region
      %72 = vst [vmem:[#allocation3] sm:$0xff] 0.0
    $region37: #{tpu_custom_call.1} parent=1 // pred_fallthru
      _
    // Predicated region
    $region38: #{tpu_custom_call.1} parent=1 // pred_check
      %p73 = pneg %p67
    $region39: #{tpu_custom_call.1} parent=1 // pred_check_branch
      %75 = sbr.rel (%p73) target = $region41
    $region40: #{tpu_custom_call.1} parent=1 // pred_region
      %76 = vst [vmem:[#allocation2] sm:$0xff] 0.0
    $region41: #{tpu_custom_call.1} parent=1 // pred_fallthru
      _
    %v77 = vld [vmem:[#allocation2] sm:$0xff]
    %v78 = vld [vmem:[#allocation4] sm:$0xf]
    %v79 = vld [vmem:[#allocation7] sm:$0xf]
    %v80 = vld [vmem:[#allocation7 + $0x4] sm:$0xf]
    %v81 = vld [vmem:[#allocation7 + $0x8] sm:$0xf]
    %v82 = vld [vmem:[#allocation7 + $0xc] sm:$0xf]
    %v83 = vld [vmem:[#allocation7 + $0x10] sm:$0xf]
    %v84 = vld [vmem:[#allocation7 + $0x14] sm:$0xf]
    %v85 = vld [vmem:[#allocation7 + $0x18] sm:$0xf]
    %v86 = vld [vmem:[#allocation7 + $0x1c] sm:$0xf]
    %v87 = vld [vmem:[#allocation7 + $0x20] sm:$0xf]
    %v88 = vld [vmem:[#allocation7 + $0x24] sm:$0xf]
    %v89 = vld [vmem:[#allocation7 + $0x28] sm:$0xf]
    %v90 = vld [vmem:[#allocation7 + $0x2c] sm:$0xf]
    %v91 = vld [vmem:[#allocation7 + $0x30] sm:$0xf]
    %v92 = vld [vmem:[#allocation7 + $0x34] sm:$0xf]
    %v93 = vld [vmem:[#allocation7 + $0x38] sm:$0xf]
    %v94 = vld [vmem:[#allocation7 + $0x3c] sm:$0xf]
    %v111 = vunpack.c.l.b16 %v79
    %v112 = vunpack.c.l.b16 %v80
    %v113 = vunpack.c.l.b16 %v81
    %v114 = vunpack.c.l.b16 %v82
    %v115 = vunpack.c.l.b16 %v83
    %v116 = vunpack.c.l.b16 %v84
    %v117 = vunpack.c.l.b16 %v85
    %v118 = vunpack.c.l.b16 %v86
    %v119 = vunpack.c.l.b16 %v87
    %v120 = vunpack.c.l.b16 %v88
    %v121 = vunpack.c.l.b16 %v89
    %v122 = vunpack.c.l.b16 %v90
    %v123 = vunpack.c.l.b16 %v91
    %v124 = vunpack.c.l.b16 %v92
    %v125 = vunpack.c.l.b16 %v93
    %v126 = vunpack.c.l.b16 %v94
    %v127 = vpack.c.b16 %v112, %v111
    %v128 = vpack.c.b16 %v114, %v113
    %v129 = vpack.c.b16 %v116, %v115
    %v130 = vpack.c.b16 %v118, %v117
    %v131 = vpack.c.b16 %v120, %v119
    %v132 = vpack.c.b16 %v122, %v121
    %v133 = vpack.c.b16 %v124, %v123
    %v134 = vpack.c.b16 %v126, %v125
    %143 = vmatpush.bf16.msra.mxu0 %v134
    %144 = vmatpush.bf16.msra.mxu0 %v133
    %145 = vmatpush.bf16.msra.mxu0 %v132
    %146 = vmatpush.bf16.msra.mxu0 %v131
    %147 = vmatpush.bf16.msra.mxu0 %v130
    %148 = vmatpush.bf16.msra.mxu0 %v129
    %149 = vmatpush.bf16.msra.mxu0 %v128
    %150 = vmatpush.bf16.msra.mxu0 %v127
    %151 = vmatmul.bf16.gmra.mxu0 %v78
    %v152 = vpop.f32.mrf.mxu0
    %v153 = vadd.f32 0.0, %v152
    %v154 = vpop.f32.mrf.mxu0
    %155 = vdwg.mxu0
    %v156 = vadd.f32 %v77, %v153
    %157 = vst [vmem:[#allocation2] sm:$0xff] %v156
    // Predicated region
    $region42: #{tpu_custom_call.1} parent=1 // pred_check
      %p158 = pneg %p67
    $region43: #{tpu_custom_call.1} parent=1 // pred_check_branch
      %160 = sbr.rel (%p158) target = $region45
    $region44: #{tpu_custom_call.1} parent=1 // pred_region
      %v161 = vld [vmem:[#allocation2] sm:$0xff]
      %v162 = vld [vmem:[%s2] sm:$0x1]
      %v164 = vperm.slane %v162, 0
      %v166 = vadd.f32 %v161, %v164
      %v167 = vtanh.pop %v166
      %v168 = vld [vmem:[#allocation3] sm:$0xff]
      %v169 = vpack.c.bf16 %v167, %v167
      %v170 = vld [vmem:[#allocation9] sm:$0xf]
      %v171 = vld [vmem:[#allocation9 + $0x4] sm:$0xf]
      %v172 = vld [vmem:[#allocation9 + $0x8] sm:$0xf]
      %v173 = vld [vmem:[#allocation9 + $0xc] sm:$0xf]
      %v174 = vld [vmem:[#allocation9 + $0x10] sm:$0xf]
      %v175 = vld [vmem:[#allocation9 + $0x14] sm:$0xf]
      %v176 = vld [vmem:[#allocation9 + $0x18] sm:$0xf]
      %v177 = vld [vmem:[#allocation9 + $0x1c] sm:$0xf]
      %v178 = vld [vmem:[#allocation9 + $0x20] sm:$0xf]
      %v179 = vld [vmem:[#allocation9 + $0x24] sm:$0xf]
      %v180 = vld [vmem:[#allocation9 + $0x28] sm:$0xf]
      %v181 = vld [vmem:[#allocation9 + $0x2c] sm:$0xf]
      %v182 = vld [vmem:[#allocation9 + $0x30] sm:$0xf]
      %v183 = vld [vmem:[#allocation9 + $0x34] sm:$0xf]
      %v184 = vld [vmem:[#allocation9 + $0x38] sm:$0xf]
      %v185 = vld [vmem:[#allocation9 + $0x3c] sm:$0xf]
      %v202 = vunpack.c.l.b16 %v170
      %v203 = vunpack.c.l.b16 %v171
      %v204 = vunpack.c.l.b16 %v172
      %v205 = vunpack.c.l.b16 %v173
      %v206 = vunpack.c.l.b16 %v174
      %v207 = vunpack.c.l.b16 %v175
      %v208 = vunpack.c.l.b16 %v176
      %v209 = vunpack.c.l.b16 %v177
      %v210 = vunpack.c.l.b16 %v178
      %v211 = vunpack.c.l.b16 %v179
      %v212 = vunpack.c.l.b16 %v180
      %v213 = vunpack.c.l.b16 %v181
      %v214 = vunpack.c.l.b16 %v182
      %v215 = vunpack.c.l.b16 %v183
      %v216 = vunpack.c.l.b16 %v184
      %v217 = vunpack.c.l.b16 %v185
      %v218 = vpack.c.b16 %v203, %v202
      %v219 = vpack.c.b16 %v205, %v204
      %v220 = vpack.c.b16 %v207, %v206
      %v221 = vpack.c.b16 %v209, %v208
      %v222 = vpack.c.b16 %v211, %v210
      %v223 = vpack.c.b16 %v213, %v212
      %v224 = vpack.c.b16 %v215, %v214
      %v225 = vpack.c.b16 %v217, %v216
      %234 = vmatpush.bf16.msra.mxu0 %v225
      %235 = vmatpush.bf16.msra.mxu0 %v224
      %236 = vmatpush.bf16.msra.mxu0 %v223
      %237 = vmatpush.bf16.msra.mxu0 %v222
      %238 = vmatpush.bf16.msra.mxu0 %v221
      %239 = vmatpush.bf16.msra.mxu0 %v220
      %240 = vmatpush.bf16.msra.mxu0 %v219
      %241 = vmatpush.bf16.msra.mxu0 %v218
      %242 = vmatmul.bf16.gmra.mxu0 %v169
      %v243 = vpop.f32.mrf.mxu0
      %v244 = vadd.f32 0.0, %v243
      %v245 = vpop.f32.mrf.mxu0
      %246 = vdwg.mxu0
      %v247 = vadd.f32 %v168, %v244
      %248 = vst [vmem:[#allocation3] sm:$0xff] %v247
    $region45: #{tpu_custom_call.1} parent=1 // pred_fallthru
      _
    // Predicated region
    $region46: #{tpu_custom_call.1} parent=1 // pred_check
      _
    $region47: #{tpu_custom_call.1} parent=1 // pred_check_branch
      %250 = sbr.rel (%p68) target = $region49
    $region48: #{tpu_custom_call.1} parent=1 // pred_region
      %v251 = vld [vmem:[#allocation3] sm:$0xff]
      %v252 = vld [vmem:[%s4] sm:$0x1]
      %v254 = vperm.slane %v252, 0
      %v256 = vadd.f32 %v251, %v254
      %v257 = vtanh.pop %v256
      %258 = vst [vmem:[#allocation10] sm:$0xff] %v257
    $region49: #{tpu_custom_call.1} parent=1 // pred_fallthru
      _
    // Predicated region
    $region50: #{tpu_custom_call.1} parent=1 // pred_check
      _
    $region51: #{tpu_custom_call.1} parent=1 // pred_check_branch
      %260 = sbr.rel (0) target = $region53
    $region52: #{tpu_custom_call.1} parent=1 // pred_region
      %262 = vsyncadd [#allocation6], 0
      %s264 = sshll.u32 [#allocation10], 4
      %s265 = int_to_ptr.vmem [resolvable:$true] %s264
      %s266 = sshll.u32 %s5, 4
      %s267 = int_to_ptr.hbm [resolvable:$true] %s266
      %269 = dma.vmem_to_hbm [thread:$0]  %s265, 128, %s267, [#allocation6]
    $region53: #{tpu_custom_call.1} parent=1 // pred_fallthru
      _
    // Predicated region
    $region54: #{tpu_custom_call.1} parent=1 // pred_check
      _
    $region55: #{tpu_custom_call.1} parent=1 // pred_check_branch
      %271 = sbr.rel (0) target = $region57
    $region56: #{tpu_custom_call.1} parent=1 // pred_region
      %273 = dma.done [#allocation6], 128
    $region57: #{tpu_custom_call.1} parent=1 // pred_fallthru
      _
    %274 = vsyncpa [#allocation5], 1
    %275 = vsyncpa [#allocation8], 1
    %276 = vsyncpa [#allocation6], 1

</llo_original>
